<compile_context>
chip_gen: v7x
topology: tpu7x:2x2x1
jax: 0.10.0
libtpu: 0.0.40
codegen_flags: <defaults>
</compile_context>

<pallas_src>
import jax
import jax.numpy as jnp
from jax.experimental import pallas as pl
from jax.experimental.pallas import tpu as pltpu

LANE = 128


def _round_up(x, m):
    return (x + m - 1) // m * m


def _vmem_limit_bytes():
    """~75% of physical VMEM: ~96 MiB on v5e/v6e (128 MiB), ~48 MiB on v7x (64 MiB)."""
    try:
        cap = int(pltpu.get_tpu_info().vmem_capacity_bytes)
    except Exception:
        cap = 0
    if cap < 32 * 1024 * 1024:          # query failed / bogus -> conservative v7x assumption
        cap = 64 * 1024 * 1024
    return min(cap * 3 // 4, 100 * 1024 * 1024)


def _pick_tiles(n):
    """Destination-row tile tm, contraction tile tk (tk | tm), padded node count."""
    n128 = _round_up(max(n, 1), 128)
    if n128 >= 2048:
        tm = 512                         # big DMAs, few grid steps, still >=4 row tiles
    elif n128 >= 1024:
        tm = 256
    else:
        tm = 128
    tk = min(256, tm)                    # 256-wide contraction fills v6e/v7x MXU
    n_pad = _round_up(n, tm)             # tk divides tm => n_pad % tk == 0 too
    return tm, tk, n_pad


def _hs_fits_resident(n_pad, width, vmem_limit):
    # Assume the pipeline double-buffers even a constant-index block; keep the
    # resident feature matrix to <= 40% of the VMEM budget so adj tiles,
    # accumulator and output tiles comfortably fit alongside it.
    resident_bytes = 2 * n_pad * width * 2          # bf16, x2 buffers
    return resident_bytes <= int(0.4 * vmem_limit)


# ----------------------------------------------------------------------------
# Kernel 1: layer-0 projection, source-side normalized:
#   hs0[j, :] = deg[j]^-1/2 * (x[j, :] @ W0)          (bf16 output)
# ----------------------------------------------------------------------------
def _project_kernel(x_ref, w_ref, dinv_ref, hs_ref):
    x = x_ref[...].astype(jnp.bfloat16)              # no-op (x is already bf16)
    h = jnp.dot(x, w_ref[...], preferred_element_type=jnp.float32)
    hs_ref[...] = (h * dinv_ref[...]).astype(hs_ref.dtype)


def project_scaled(x, w_bf16, dinv, *, tm, vmem_limit):
    n, fi = x.shape
    fo = w_bf16.shape[1]
    return pl.pallas_call(
        _project_kernel,
        out_shape=jax.ShapeDtypeStruct((n, fo), jnp.bfloat16),
        grid_spec=pltpu.PrefetchScalarGridSpec(
            num_scalar_prefetch=0,
            grid=(n // tm,),
            in_specs=[
                pl.BlockSpec((tm, fi), lambda i: (i, 0)),
                pl.BlockSpec((fi, fo), lambda i: (0, 0)),
                pl.BlockSpec((tm, 1), lambda i: (i, 0)),
            ],
            out_specs=pl.BlockSpec((tm, fo), lambda i: (i, 0)),
        ),
        compiler_params=pltpu.CompilerParams(
            dimension_semantics=("parallel",),
            vmem_limit_bytes=vmem_limit,
        ),
    )(x, w_bf16, dinv)


# ----------------------------------------------------------------------------
# Kernel 2: layer-0 aggregation with fused bn/relu + layer-1 projection.
# Grid = (dst-row tiles ["parallel"], src-col tiles ["arbitrary"]).
# Outputs: z (f32)  and  hs1[j] = deg[j]^-1/2 * (relu(bn(z[j])) @ W1)  (bf16).
# `hs_resident=True` keeps the whole hs0 matrix in VMEM (DMA'd once) and
# slices the current source tile in-kernel; otherwise hs0 tiles are streamed.
# ----------------------------------------------------------------------------
def _make_agg0_kernel(hs_resident, tk):
    def kernel(mask_ref, hs0_ref, dinv_ref, b0_ref, bn_scale_ref,
               bn_shift_ref, w1_ref, z_ref, hs1_ref, acc_ref):
        k = pl.program_id(1)

        @pl.when(k == 0)
        def _():
            acc_ref[...] = jnp.zeros_like(acc_ref)

        if hs_resident:
            src = pl.multiple_of(k * tk, tk)
            hs_tile = hs0_ref[pl.ds(src, tk), :]
        else:
            hs_tile = hs0_ref[...]

        # (TM, TK) int8 mask -> bf16 MXU operand; f32 accumulation.
        acc_ref[...] += jnp.dot(mask_ref[...].astype(jnp.bfloat16), hs_tile,
                                preferred_element_type=jnp.float32)

        @pl.when(k == pl.num_programs(1) - 1)
        def _():
            dinv = dinv_ref[...]                                  # (TM, 1)
            z = acc_ref[...] * dinv + b0_ref[...]                 # dst scale + bias
            z_ref[...] = z.astype(z_ref.dtype)
            # relu(dropout_{p=0}(bn(z))) then layer-1 projection, src-side scaled.
            a = jnp.maximum(z * bn_scale_ref[...] + bn_shift_ref[...], 0.0)
            h1 = jnp.dot(a.astype(jnp.bfloat16), w1_ref[...],
                         preferred_element_type=jnp.float32)
            hs1_ref[...] = (h1 * dinv).astype(hs1_ref.dtype)

    return kernel


def agg0_fused(adj, hs0, dinv, b0, bn_scale, bn_shift, w1_bf16, *,
               tm, tk, hs_resident, vmem_limit):
    n = adj.shape[0]
    fh = hs0.shape[1]
    fo = w1_bf16.shape[1]
    if hs_resident:
        hs_spec = pl.BlockSpec((n, fh), lambda i, k: (0, 0))     # VMEM-resident
    else:
        hs_spec = pl.BlockSpec((tk, fh), lambda i, k: (k, 0))    # streamed tiles
    return pl.pallas_call(
        _make_agg0_kernel(hs_resident, tk),
        out_shape=(jax.ShapeDtypeStruct((n, fh), jnp.float32),
                   jax.ShapeDtypeStruct((n, fo), jnp.bfloat16)),
        grid_spec=pltpu.PrefetchScalarGridSpec(
            num_scalar_prefetch=0,
            grid=(n // tm, n // tk),
            in_specs=[
                pl.BlockSpec((tm, tk), lambda i, k: (i, k)),   # int8 adj tile
                hs_spec,                                       # scaled features
                pl.BlockSpec((tm, 1), lambda i, k: (i, 0)),    # deg^-1/2
                pl.BlockSpec((1, fh), lambda i, k: (0, 0)),    # bias0
                pl.BlockSpec((1, fh), lambda i, k: (0, 0)),    # bn scale
                pl.BlockSpec((1, fh), lambda i, k: (0, 0)),    # bn shift
                pl.BlockSpec((fh, fo), lambda i, k: (0, 0)),   # W1 (bf16)
            ],
            out_specs=(
                pl.BlockSpec((tm, fh), lambda i, k: (i, 0)),   # z
                pl.BlockSpec((tm, fo), lambda i, k: (i, 0)),   # hs1
            ),
            scratch_shapes=[pltpu.VMEM((tm, fh), jnp.float32)],
        ),
        compiler_params=pltpu.CompilerParams(
            dimension_semantics=("parallel", "arbitrary"),
            vmem_limit_bytes=vmem_limit,
        ),
    )(adj, hs0, dinv, b0, bn_scale, bn_shift, w1_bf16)


# ----------------------------------------------------------------------------
# Kernel 3: layer-1 aggregation (same tiling, plain epilogue).
# ----------------------------------------------------------------------------
def _make_agg_kernel(hs_resident, tk):
    def kernel(mask_ref, hs_ref, dinv_ref, b_ref, out_ref, acc_ref):
        k = pl.program_id(1)

        @pl.when(k == 0)
        def _():
            acc_ref[...] = jnp.zeros_like(acc_ref)

        if hs_resident:
            src = pl.multiple_of(k * tk, tk)
            hs_tile = hs_ref[pl.ds(src, tk), :]
        else:
            hs_tile = hs_ref[...]

        acc_ref[...] += jnp.dot(mask_ref[...].astype(jnp.bfloat16), hs_tile,
                                preferred_element_type=jnp.float32)

        @pl.when(k == pl.num_programs(1) - 1)
        def _():
            out_ref[...] = (acc_ref[...] * dinv_ref[...] + b_ref[...]).astype(out_ref.dtype)

    return kernel


def aggregate(adj, hs, dinv, b, *, tm, tk, hs_resident, vmem_limit):
    n = adj.shape[0]
    f = hs.shape[1]
    if hs_resident:
        hs_spec = pl.BlockSpec((n, f), lambda i, k: (0, 0))
    else:
        hs_spec = pl.BlockSpec((tk, f), lambda i, k: (k, 0))
    return pl.pallas_call(
        _make_agg_kernel(hs_resident, tk),
        out_shape=jax.ShapeDtypeStruct((n, f), jnp.float32),
        grid_spec=pltpu.PrefetchScalarGridSpec(
            num_scalar_prefetch=0,
            grid=(n // tm, n // tk),
            in_specs=[
                pl.BlockSpec((tm, tk), lambda i, k: (i, k)),
                hs_spec,
                pl.BlockSpec((tm, 1), lambda i, k: (i, 0)),
                pl.BlockSpec((1, f), lambda i, k: (0, 0)),
            ],
            out_specs=pl.BlockSpec((tm, f), lambda i, k: (i, 0)),
            scratch_shapes=[pltpu.VMEM((tm, f), jnp.float32)],
        ),
        compiler_params=pltpu.CompilerParams(
            dimension_semantics=("parallel", "arbitrary"),
            vmem_limit_bytes=vmem_limit,
        ),
    )(adj, hs, dinv, b)


# ----------------------------------------------------------------------------
# Graph preprocessing + forward wrapper
# ----------------------------------------------------------------------------
def build_dense_adj_mask(edge_index, num_nodes, num_nodes_padded):
    """adj[i, j] = 1 (int8) iff edge j -> i exists; self loops added."""
    src, dst = edge_index[0], edge_index[1]
    adj = jnp.zeros((num_nodes_padded, num_nodes_padded), jnp.int8)
    adj = adj.at[dst, src].set(1)
    diag = jnp.arange(num_nodes)
    adj = adj.at[diag, diag].set(1)        # PyG add_self_loops
    return adj


def mygcn_forward(x, edge_index, params, bn_params, *, force_stream=False):
    """MyGCN.forward: returns (x_out, z) like the PyTorch module (eval mode)."""
    n, f_in = x.shape
    hidden = params[0]["w"].shape[1]
    f_out = params[1]["w"].shape[1]

    tm, tk, n_pad = _pick_tiles(n)
    fi_pad = _round_up(f_in, LANE)
    fh_pad = _round_up(hidden, LANE)
    fo_pad = _round_up(f_out, LANE)

    vmem_limit = _vmem_limit_bytes()
    res0 = (not force_stream) and _hs_fits_resident(n_pad, fh_pad, vmem_limit)
    res1 = (not force_stream) and _hs_fits_resident(n_pad, fo_pad, vmem_limit)

    # Dense int8 adjacency mask + symmetric-normalization vector deg^-1/2.
    adj = build_dense_adj_mask(edge_index, n, n_pad)
    deg = jnp.sum(adj, axis=1, dtype=jnp.int32).astype(jnp.float32)[:, None]
    dinv = jnp.where(deg > 0.0, jax.lax.rsqrt(jnp.maximum(deg, 1e-12)), 0.0)

    # Lane-dense (128-padded) parameters / features; padding sliced off below.
    xp = jnp.zeros((n_pad, fi_pad), jnp.bfloat16).at[:n, :f_in].set(
        x.astype(jnp.bfloat16))
    w0 = jnp.zeros((fi_pad, fh_pad), jnp.float32).at[:f_in, :hidden].set(params[0]["w"])
    b0 = jnp.zeros((1, fh_pad), jnp.float32).at[0, :hidden].set(params[0]["bias"])
    w1 = jnp.zeros((fh_pad, fo_pad), jnp.float32).at[:hidden, :f_out].set(params[1]["w"])
    b1 = jnp.zeros((1, fo_pad), jnp.float32).at[0, :f_out].set(params[1]["bias"])

    # Eval-mode BatchNorm1d folded into a per-feature scale/shift.
    inv_std = jax.lax.rsqrt(bn_params["running_var"] + bn_params["eps"])
    scale = bn_params["gamma"] * inv_std
    shift = bn_params["beta"] - bn_params["running_mean"] * scale
    bn_scale = jnp.zeros((1, fh_pad), jnp.float32).at[0, :hidden].set(scale)
    bn_shift = jnp.zeros((1, fh_pad), jnp.float32).at[0, :hidden].set(shift)

    w0_bf = w0.astype(jnp.bfloat16)
    w1_bf = w1.astype(jnp.bfloat16)

    # Call 1: layer-0 projection (source-side scaled, bf16).
    hs0 = project_scaled(xp, w0_bf, dinv, tm=tm, vmem_limit=vmem_limit)
    # Call 2: layer-0 aggregation + fused bn/relu + layer-1 projection.
    z_pad, hs1 = agg0_fused(adj, hs0, dinv, b0, bn_scale, bn_shift, w1_bf,
                            tm=tm, tk=tk, hs_resident=res0, vmem_limit=vmem_limit)
    # Call 3: layer-1 aggregation.
    x_out_pad = aggregate(adj, hs1, dinv, b1, tm=tm, tk=tk,
                          hs_resident=res1, vmem_limit=vmem_limit)

    return x_out_pad[:n, :f_out], z_pad[:n, :hidden]


if __name__ == "__main__":
    # Small synthetic graph consistent with the module: x (N, in), edge_index (2, E).
    N = 200
    IN_CHANNELS = 16
    HIDDEN = 64          # module default hidden=64
    OUT_CHANNELS = 8
    E = 800

    key = jax.random.PRNGKey(0)
    k_x, k_e, k_w0, k_w1 = jax.random.split(key, 4)

    x = jax.random.normal(k_x, (N, IN_CHANNELS), jnp.float32)
    edge_index = jax.random.randint(k_e, (2, E), 0, N, dtype=jnp.int32)

    def glorot(k, fi, fo):
        s = jnp.sqrt(6.0 / (fi + fo))
        return jax.random.uniform(k, (fi, fo), jnp.float32, -s, s)

    params = (
        {"w": glorot(k_w0, IN_CHANNELS, HIDDEN),
         "bias": jnp.zeros((HIDDEN,), jnp.float32)},
        {"w": glorot(k_w1, HIDDEN, OUT_CHANNELS),
         "bias": jnp.zeros((OUT_CHANNELS,), jnp.float32)},
    )
    bn_params = {  # freshly-initialized BatchNorm1d(hidden) in eval mode
        "gamma": jnp.ones((HIDDEN,), jnp.float32),
        "beta": jnp.zeros((HIDDEN,), jnp.float32),
        "running_mean": jnp.zeros((HIDDEN,), jnp.float32),
        "running_var": jnp.ones((HIDDEN,), jnp.float32),
        "eps": 1e-5,
    }

    # Primary (VMEM-resident feature) path + streaming fallback path.
    x_out, z = mygcn_forward(x, edge_index, params, bn_params)
    x_out_s, z_s = mygcn_forward(x, edge_index, params, bn_params, force_stream=True)
    jax.block_until_ready((x_out, z, x_out_s, z_s))

    # Pure-JAX f32 reference with identical dense-graph semantics.
    adj_ref = jnp.zeros((N, N), jnp.float32).at[edge_index[1], edge_index[0]].set(1.0)
    adj_ref = jnp.maximum(adj_ref, jnp.eye(N, dtype=jnp.float32))
    deg_r = adj_ref.sum(axis=1)
    dinv_r = jnp.where(deg_r > 0, deg_r ** -0.5, 0.0)
    norm_adj = dinv_r[:, None] * adj_ref * dinv_r[None, :]
    z_ref = norm_adj @ (x @ params[0]["w"]) + params[0]["bias"]
    inv_std = (bn_params["running_var"] + bn_params["eps"]) ** -0.5
    a_ref = jnp.maximum((z_ref - bn_params["running_mean"]) * inv_std
                        * bn_params["gamma"] + bn_params["beta"], 0.0)
    x_ref = norm_adj @ (a_ref @ params[1]["w"]) + params[1]["bias"]

    for xo, zz in ((x_out, z), (x_out_s, z_s)):
        assert xo.shape == (N, OUT_CHANNELS) and zz.shape == (N, HIDDEN)
        assert bool(jnp.all(jnp.isfinite(xo))) and bool(jnp.all(jnp.isfinite(zz)))
        assert bool(jnp.allclose(zz, z_ref, rtol=5e-2, atol=5e-2))
        assert bool(jnp.allclose(xo, x_ref, rtol=5e-2, atol=5e-2))
    print("KERNEL_OK")
</pallas_src>

<mosaic_0001>
module attributes {stable_mosaic.version = 11 : i64} {
  func.func @_project_kernel(%arg0: i32, %arg1: memref<128x128xbf16, #tpu.memory_space<vmem>>, %arg2: memref<128x128xbf16, #tpu.memory_space<vmem>>, %arg3: memref<128x1xf32, #tpu.memory_space<vmem>>, %arg4: memref<128x128xbf16, #tpu.memory_space<vmem>>) attributes {dimension_semantics = [#tpu.dimension_semantics<parallel>], iteration_bounds = array<i64: 2>, scalar_prefetch = 0 : i64, scratch_operands = 0 : i64, tpu.core_type = #tpu.core_type<tc>, window_params = [{transform_indices = @transform_0, window_bounds = array<i64: 128, 128>}, {pipeline_mode = #tpu.pipeline_mode<synchronous>, transform_indices = @transform_1, window_bounds = array<i64: 128, 128>}, {transform_indices = @transform_2, window_bounds = array<i64: 128, 1>}, {transform_indices = @transform_3, window_bounds = array<i64: 128, 128>}]} {
    %c0 = arith.constant 0 : index
    %c0_0 = arith.constant 0 : index
    %0 = vector.load %arg1[%c0, %c0_0] : memref<128x128xbf16, #tpu.memory_space<vmem>>, vector<128x128xbf16>
    %c0_1 = arith.constant 0 : index
    %c0_2 = arith.constant 0 : index
    %1 = vector.load %arg2[%c0_1, %c0_2] : memref<128x128xbf16, #tpu.memory_space<vmem>>, vector<128x128xbf16>
    %cst = arith.constant dense<0.000000e+00> : vector<128x128xf32>
    %2 = tpu.matmul %0, %1, %cst {dimension_numbers = #tpu.dot_dimension_numbers<[1], [0], [0], [1], [0, 0, 1, 1], [], []>} : vector<128x128xbf16>, vector<128x128xbf16>, vector<128x128xf32> -> vector<128x128xf32>
    %c0_3 = arith.constant 0 : index
    %c0_4 = arith.constant 0 : index
    %3 = vector.load %arg3[%c0_3, %c0_4] : memref<128x1xf32, #tpu.memory_space<vmem>>, vector<128x1xf32>
    %4 = vector.broadcast %3 : vector<128x1xf32> to vector<128x128xf32>
    %5 = arith.mulf %2, %4 : vector<128x128xf32>
    %6 = arith.truncf %5 : vector<128x128xf32> to vector<128x128xbf16>
    %c0_5 = arith.constant 0 : index
    %c0_6 = arith.constant 0 : index
    %7 = vector.load %arg4[%c0_5, %c0_6] : memref<128x128xbf16, #tpu.memory_space<vmem>>, vector<128x128xbf16>
    tpu.vector_store %arg4[%c0_5, %c0_6], %6 {strides = array<i32>} : memref<128x128xbf16, #tpu.memory_space<vmem>>, vector<128x128xbf16>,
    return
  }
  func.func @transform_0(%arg0: i32) -> (i32, i32) {
    %c0_i32 = arith.constant 0 : i32
    %c0_i32_0 = arith.constant 0 : i32
    return %arg0, %c0_i32 : i32, i32
  }
  func.func @transform_1(%arg0: i32) -> (i32, i32) {
    %c0_i32 = arith.constant 0 : i32
    %c0_i32_0 = arith.constant 0 : i32
    %c0_i32_1 = arith.constant 0 : i32
    return %c0_i32, %c0_i32_0 : i32, i32
  }
  func.func @transform_2(%arg0: i32) -> (i32, i32) {
    %c0_i32 = arith.constant 0 : i32
    %c0_i32_0 = arith.constant 0 : i32
    return %arg0, %c0_i32 : i32, i32
  }
  func.func @transform_3(%arg0: i32) -> (i32, i32) {
    %c0_i32 = arith.constant 0 : i32
    %c0_i32_0 = arith.constant 0 : i32
    return %arg0, %c0_i32 : i32, i32
  }
}

</mosaic_0001>

<llo_original>
// kernel: tpu_custom_call.1
$region0: #{tpu_custom_call.1}
  #allocation0 [shape = 'u32[]', space=smem, size = 0x4, offset = 0x4, fixed_abs, tag = 'smem constant byte address 0x4 - core index']
  #allocation1 [shape = 'u32[144,128]{1,0:T(1,128)}', space=vmem, size = 0x12000, scoped, tag = 'internal scratch']
  %s0 = inlined_call_operand.vmem [shape: bf16[256,128], index: 0, kind: input, shape index: {}]
  %s1 = inlined_call_operand.vmem [shape: bf16[128,128], index: 1, kind: input, shape index: {}]
  %s2 = inlined_call_operand.vmem [shape: f32[256,1], index: 2, kind: input, shape index: {}]
  %s3 = inlined_call_operand.hbm [shape: bf16[256,128], index: 3, kind: output, shape index: {}]
  %s4 = sld [smem:[#allocation0]]
  $region45: #{tpu_custom_call.1} parent=0
    _
  %s6 = ssub.s32 1, %s4
  %s7 = scalar_select 0, %s6, %s4
  $region1: #{tpu_custom_call.1} parent=0
    #allocation2 [shape = 'u8[65536]{0}', space=vmem, size = 0x10000, scoped, tag = 'output window, operand 0']
    #allocation3 [shape = 's32[2]{0}', space=sflag, size = 0x8, scoped, tag = 'scoped memory for tpu_custom_call.1']
    %8 = vsyncpa [#allocation3], 0
    %s9 = scalar_lea.sflag [#allocation3], 1
    %10 = vsyncpa %s9, 0
    loop: start=0, step=1, limit=4
    $region2: #{tpu_custom_call.1} parent=1 // loop_pre_header
      _
    $region3: #{tpu_custom_call.1} parent=1 // loop_header
      %s12 = sphi 0, %s16
      %p13 = scmp.ge.s32.totalorder %s12, 4
      %s22 = sphi 0, %s24
      %s25 = sphi 0, %s22
      %s26 = sphi 0, %s25
      %s42 = sphi 0, %s26
      %s46 = sphi 0, %s46
      %s48 = sphi 0, %s46
      %s49 = sphi 0, %s48
      %s63 = sphi 0, %s49
      %s69 = sphi 0, %s71
      %s72 = sphi 0, %s69
      %s73 = sphi 0, %s72
      %s89 = sphi 0, %s73
      %s95 = sphi 0, %s97
      %s98 = sphi 0, %s95
      %s99 = sphi 0, %s98
      %s115 = sphi 0, %s99
    $region4: #{tpu_custom_call.1} parent=1 // loop_header_branch
      %15 = sbr.rel (%p13) target = $region8
    $region5: #{tpu_custom_call.1} parent=1 // loop_body
      %s17 = ssub.s32 %s12, 1
      %s18 = ssub.s32 %s12, 2
      %s19 = sadd.s32 %s12, 1
      %s20 = ssub.s32 %s12, %s19
      %p21 = scmp.eq.s32.totalorder %s20, 0
      %s23 = sadd.s32 %s22, 1
      %s24 = scalar_select %p21, %s22, %s23
      %p27 = pneg %p21
      %p28 = scmp.eq.s32.totalorder %s12, 1
      %p29 = por %p27, %p28
      %p30 = scmp.ne.s32.totalorder %s22, %s25
      %p31 = scmp.eq.s32.totalorder %s12, 0
      %p32 = por %p30, %p31
      %p33 = scmp.ne.s32.totalorder %s22, %s25
      %p34 = scmp.eq.s32.totalorder %s17, 1
      %p35 = por %p33, %p34
      %p36 = scmp.ne.s32.totalorder %s25, %s26
      %p37 = scmp.eq.s32.totalorder %s17, 0
      %p38 = por %p36, %p37
      %p39 = scmp.ne.s32.totalorder %s25, %s26
      %p40 = scmp.eq.s32.totalorder %s18, 1
      %p41 = por %p39, %p40
      %p43 = scmp.ne.s32.totalorder %s26, %s42
      %p44 = scmp.eq.s32.totalorder %s18, 0
      %p45 = por %p43, %p44
      %s47 = sadd.s32 %s46, 1
      %p50 = scmp.eq.s32.totalorder %s12, 1
      %p51 = scmp.ne.s32.totalorder %s46, %s48
      %p52 = scmp.eq.s32.totalorder %s12, 0
      %p53 = por %p51, %p52
      %p54 = scmp.ne.s32.totalorder %s46, %s48
      %p55 = scmp.eq.s32.totalorder %s17, 1
      %p56 = por %p54, %p55
      %p57 = scmp.ne.s32.totalorder %s48, %s49
      %p58 = scmp.eq.s32.totalorder %s17, 0
      %p59 = por %p57, %p58
      %p60 = scmp.ne.s32.totalorder %s48, %s49
      %p61 = scmp.eq.s32.totalorder %s18, 1
      %p62 = por %p60, %p61
      %p64 = scmp.ne.s32.totalorder %s49, %s63
      %p65 = scmp.eq.s32.totalorder %s18, 0
      %p66 = por %p64, %p65
      %s67 = ssub.s32 %s12, %s19
      %p68 = scmp.eq.s32.totalorder %s67, 0
      %s70 = sadd.s32 %s69, 1
      %s71 = scalar_select %p68, %s69, %s70
      %p74 = pneg %p68
      %p75 = scmp.eq.s32.totalorder %s12, 1
      %p76 = por %p74, %p75
      %p77 = scmp.ne.s32.totalorder %s69, %s72
      %p78 = scmp.eq.s32.totalorder %s12, 0
      %p79 = por %p77, %p78
      %p80 = scmp.ne.s32.totalorder %s69, %s72
      %p81 = scmp.eq.s32.totalorder %s17, 1
      %p82 = por %p80, %p81
      %p83 = scmp.ne.s32.totalorder %s72, %s73
      %p84 = scmp.eq.s32.totalorder %s17, 0
      %p85 = por %p83, %p84
      %p86 = scmp.ne.s32.totalorder %s72, %s73
      %p87 = scmp.eq.s32.totalorder %s18, 1
      %p88 = por %p86, %p87
      %p90 = scmp.ne.s32.totalorder %s73, %s89
      %p91 = scmp.eq.s32.totalorder %s18, 0
      %p92 = por %p90, %p91
      %s93 = ssub.s32 %s12, %s19
      %p94 = scmp.eq.s32.totalorder %s93, 0
      %s96 = sadd.s32 %s95, 1
      %s97 = scalar_select %p94, %s95, %s96
      %p100 = pneg %p94
      %p101 = scmp.eq.s32.totalorder %s12, 1
      %p102 = por %p100, %p101
      %p103 = scmp.ne.s32.totalorder %s95, %s98
      %p104 = scmp.eq.s32.totalorder %s12, 0
      %p105 = por %p103, %p104
      %p106 = scmp.ne.s32.totalorder %s95, %s98
      %p107 = scmp.eq.s32.totalorder %s17, 1
      %p108 = por %p106, %p107
      %p109 = scmp.ne.s32.totalorder %s98, %s99
      %p110 = scmp.eq.s32.totalorder %s17, 0
      %p111 = por %p109, %p110
      %p112 = scmp.ne.s32.totalorder %s98, %s99
      %p113 = scmp.eq.s32.totalorder %s18, 1
      %p114 = por %p112, %p113
      %p116 = scmp.ne.s32.totalorder %s99, %s115
      %p117 = scmp.eq.s32.totalorder %s18, 0
      %p118 = por %p116, %p117
      %p119 = scmp.le.s32.totalorder 1, %s12
      %p120 = scmp.lt.s32.totalorder %s12, 3
      %p121 = pnand %p119, %p120
      %p122 = pneg %p121
      // Predicated region
      $region9: #{tpu_custom_call.1} parent=5 // pred_check
        _
      $region10: #{tpu_custom_call.1} parent=5 // pred_check_branch
        %124 = sbr.rel (%p121) target = $region12
      $region11: #{tpu_custom_call.1} parent=5 // pred_region
        %s125 = ssub.s32 %s12, 1
        // Predicated region
        $region13: #{tpu_custom_call.1} parent=11 // pred_check
          %p126 = pneg %p59
        $region14: #{tpu_custom_call.1} parent=11 // pred_check_branch
          %128 = sbr.rel (%p126) target = $region16
        $region15: #{tpu_custom_call.1} parent=11 // pred_region
          _
        $region16: #{tpu_custom_call.1} parent=11 // pred_fallthru
          _
      $region12: #{tpu_custom_call.1} parent=5 // pred_fallthru
        _
      %p129 = scmp.lt.s32.totalorder %s12, 2
      // Predicated region
      $region17: #{tpu_custom_call.1} parent=5 // pred_check
        %p130 = pneg %p129
      $region18: #{tpu_custom_call.1} parent=5 // pred_check_branch
        %132 = sbr.rel (%p130) target = $region20
      $region19: #{tpu_custom_call.1} parent=5 // pred_region
        // Predicated region
        $region21: #{tpu_custom_call.1} parent=19 // pred_check
          %p133 = pneg %p32
        $region22: #{tpu_custom_call.1} parent=19 // pred_check_branch
          %135 = sbr.rel (%p133) target = $region24
        $region23: #{tpu_custom_call.1} parent=19 // pred_region
          %s136 = smul.u32 16, %s12
          %p137 = scmp.lt.s32.totalorder %s136, 31
          %s138 = scalar_select %p137, %s136, 31
          %s139 = smul.addr %s138, 4
          %s140 = scalar_lea.vmem %s0, %s139
          %s141 = smul.u32 16, %s12
        $region24: #{tpu_custom_call.1} parent=19 // pred_fallthru
          _
        // Predicated region
        $region25: #{tpu_custom_call.1} parent=19 // pred_check
          %p142 = pneg %p79
        $region26: #{tpu_custom_call.1} parent=19 // pred_check_branch
          %144 = sbr.rel (%p142) target = $region28
        $region27: #{tpu_custom_call.1} parent=19 // pred_region
          %s145 = smul.u32 16, %s12
          %p146 = scmp.lt.s32.totalorder %s145, 31
          %s147 = scalar_select %p146, %s145, 31
          %s148 = smul.addr %s147, 8
          %s149 = scalar_lea.vmem %s2, %s148
          %s150 = smul.u32 16, %s12
        $region28: #{tpu_custom_call.1} parent=19 // pred_fallthru
          _
      $region20: #{tpu_custom_call.1} parent=5 // pred_fallthru
        _
      %p151 = scmp.le.s32.totalorder 1, %s12
      %p152 = scmp.lt.s32.totalorder %s12, 3
      %p153 = pnand %p151, %p152
      %p154 = pneg %p153
      // Predicated region
      $region29: #{tpu_custom_call.1} parent=5 // pred_check
        _
      $region30: #{tpu_custom_call.1} parent=5 // pred_check_branch
        %156 = sbr.rel (%p153) target = $region32
      $region31: #{tpu_custom_call.1} parent=5 // pred_region
        %s157 = ssub.s32 %s12, 1
        %s158 = smul.u32 16, %s17
        %p159 = scmp.lt.s32.totalorder %s158, 31
        %s160 = scalar_select %p159, %s158, 31
        %s161 = smul.addr %s160, 4
        %s162 = scalar_lea.vmem %s0, %s161
        %p163 = pneg %p38
        %p164 = pneg %p35
        %p165 = pneg %p59
        %p166 = pneg %p56
        %s167 = smul.u32 16, %s17
        %p168 = scmp.lt.s32.totalorder %s167, 31
        %s169 = scalar_select %p168, %s167, 31
        %s170 = smul.addr %s169, 8
        %s171 = scalar_lea.vmem %s2, %s170
        %p172 = pneg %p85
        %p173 = pneg %p82
        %p174 = pneg %p111
        %p175 = pneg %p108
        %s176 = sand.u32 %s98, 1
        %s177 = scalar_lea.sflag [#allocation3], %s176
        %s178 = sand.u32 %s98, 1
        %s179 = smul.addr %s178, 64
        %s180 = scalar_lea.vmem [#allocation2], %s179
        %s181 = smul.u32 16, %s17
        %p182 = scmp.lt.s32.totalorder %s181, 31
        %s183 = scalar_select %p182, %s181, 31
        %s184 = smul.addr %s183, 4
        %s185 = scalar_lea.vmem %s0, %s184
        %s186 = smul.u32 16, %s17
        %s187 = smul.u32 16, %s17
        %p188 = scmp.lt.s32.totalorder %s187, 31
        %s189 = scalar_select %p188, %s187, 31
        %s190 = smul.addr %s189, 8
        %s191 = scalar_lea.vmem %s2, %s190
        %s192 = smul.u32 16, %s17
        %s193 = smul.u32 16, %s17
        %v195 = vld [vmem:[%s185] sm:$0xf]
        %v196 = vld [vmem:[%s185 + $0x4] sm:$0xf]
        %v197 = vld [vmem:[%s185 + $0x8] sm:$0xf]
        %v198 = vld [vmem:[%s185 + $0xc] sm:$0xf]
        %v199 = vld [vmem:[%s185 + $0x10] sm:$0xf]
        %v200 = vld [vmem:[%s185 + $0x14] sm:$0xf]
        %v201 = vld [vmem:[%s185 + $0x18] sm:$0xf]
        %v202 = vld [vmem:[%s185 + $0x1c] sm:$0xf]
        %v203 = vld [vmem:[%s185 + $0x20] sm:$0xf]
        %v204 = vld [vmem:[%s185 + $0x24] sm:$0xf]
        %v205 = vld [vmem:[%s185 + $0x28] sm:$0xf]
        %v206 = vld [vmem:[%s185 + $0x2c] sm:$0xf]
        %v207 = vld [vmem:[%s185 + $0x30] sm:$0xf]
        %v208 = vld [vmem:[%s185 + $0x34] sm:$0xf]
        %v209 = vld [vmem:[%s185 + $0x38] sm:$0xf]
        %v210 = vld [vmem:[%s185 + $0x3c] sm:$0xf]
        %v211 = vld [vmem:[%s1] sm:$0xf]
        %v212 = vld [vmem:[%s1 + $0x4] sm:$0xf]
        %v213 = vld [vmem:[%s1 + $0x8] sm:$0xf]
        %v214 = vld [vmem:[%s1 + $0xc] sm:$0xf]
        %v215 = vld [vmem:[%s1 + $0x10] sm:$0xf]
        %v216 = vld [vmem:[%s1 + $0x14] sm:$0xf]
        %v217 = vld [vmem:[%s1 + $0x18] sm:$0xf]
        %v218 = vld [vmem:[%s1 + $0x1c] sm:$0xf]
        %v219 = vld [vmem:[%s1 + $0x20] sm:$0xf]
        %v220 = vld [vmem:[%s1 + $0x24] sm:$0xf]
        %v221 = vld [vmem:[%s1 + $0x28] sm:$0xf]
        %v222 = vld [vmem:[%s1 + $0x2c] sm:$0xf]
        %v223 = vld [vmem:[%s1 + $0x30] sm:$0xf]
        %v224 = vld [vmem:[%s1 + $0x34] sm:$0xf]
        %v225 = vld [vmem:[%s1 + $0x38] sm:$0xf]
        %v226 = vld [vmem:[%s1 + $0x3c] sm:$0xf]
        %v243 = vunpack.c.l.b16 %v195
        %v244 = vunpack.c.l.b16 %v196
        %v245 = vunpack.c.l.b16 %v197
        %v246 = vunpack.c.l.b16 %v198
        %v247 = vunpack.c.l.b16 %v199
        %v248 = vunpack.c.l.b16 %v200
        %v249 = vunpack.c.l.b16 %v201
        %v250 = vunpack.c.l.b16 %v202
        %v251 = vunpack.c.l.b16 %v203
        %v252 = vunpack.c.l.b16 %v204
        %v253 = vunpack.c.l.b16 %v205
        %v254 = vunpack.c.l.b16 %v206
        %v255 = vunpack.c.l.b16 %v207
        %v256 = vunpack.c.l.b16 %v208
        %v257 = vunpack.c.l.b16 %v209
        %v258 = vunpack.c.l.b16 %v210
        %v259 = vpack.c.b16 %v244, %v243
        %v260 = vpack.c.b16 %v246, %v245
        %v261 = vpack.c.b16 %v248, %v247
        %v262 = vpack.c.b16 %v250, %v249
        %v263 = vpack.c.b16 %v252, %v251
        %v264 = vpack.c.b16 %v254, %v253
        %v265 = vpack.c.b16 %v256, %v255
        %v266 = vpack.c.b16 %v258, %v257
        %v291 = vunpack.c.l.b16 %v211
        %v292 = vunpack.c.l.b16 %v212
        %v293 = vunpack.c.l.b16 %v213
        %v294 = vunpack.c.l.b16 %v214
        %v295 = vunpack.c.l.b16 %v215
        %v296 = vunpack.c.l.b16 %v216
        %v297 = vunpack.c.l.b16 %v217
        %v298 = vunpack.c.l.b16 %v218
        %v299 = vunpack.c.l.b16 %v219
        %v300 = vunpack.c.l.b16 %v220
        %v301 = vunpack.c.l.b16 %v221
        %v302 = vunpack.c.l.b16 %v222
        %v303 = vunpack.c.l.b16 %v223
        %v304 = vunpack.c.l.b16 %v224
        %v305 = vunpack.c.l.b16 %v225
        %v306 = vunpack.c.l.b16 %v226
        %v307 = vpack.c.b16 %v292, %v291
        %v308 = vpack.c.b16 %v294, %v293
        %v309 = vpack.c.b16 %v296, %v295
        %v310 = vpack.c.b16 %v298, %v297
        %v311 = vpack.c.b16 %v300, %v299
        %v312 = vpack.c.b16 %v302, %v301
        %v313 = vpack.c.b16 %v304, %v303
        %v314 = vpack.c.b16 %v306, %v305
        %323 = vmatprep.subr.bf16.mxu0 0
        %324 = vmatpush1.bf16.msra.mxu0 %v307
        %325 = vmatprep.subr.bf16.mxu0 0
        %326 = vmatpush1.bf16.msra.mxu0 %v308
        %327 = vmatprep.subr.bf16.mxu0 0
        %328 = vmatpush1.bf16.msra.mxu0 %v309
        %329 = vmatprep.subr.bf16.mxu0 0
        %330 = vmatpush1.bf16.msra.mxu0 %v310
        %331 = vmatprep.subr.bf16.mxu0 0
        %332 = vmatpush1.bf16.msra.mxu0 %v311
        %333 = vmatprep.subr.bf16.mxu0 0
        %334 = vmatpush1.bf16.msra.mxu0 %v312
        %335 = vmatprep.subr.bf16.mxu0 0
        %336 = vmatpush1.bf16.msra.mxu0 %v313
        %337 = vmatprep.subr.bf16.mxu0 0
        %338 = vmatpush1.bf16.msra.mxu0 %v314
        %339 = vmatprep.subr.bf16.mxu0 0
        %340 = vmatpush1.bf16.msra.mxu0 0
        %341 = vmatprep.subr.bf16.mxu0 0
        %342 = vmatpush1.bf16.msra.mxu0 0
        %343 = vmatprep.subr.bf16.mxu0 0
        %344 = vmatpush1.bf16.msra.mxu0 0
        %345 = vmatprep.subr.bf16.mxu0 0
        %346 = vmatpush1.bf16.msra.mxu0 0
        %347 = vmatprep.subr.bf16.mxu0 0
        %348 = vmatpush1.bf16.msra.mxu0 0
        %349 = vmatprep.subr.bf16.mxu0 0
        %350 = vmatpush1.bf16.msra.mxu0 0
        %351 = vmatprep.subr.bf16.mxu0 0
        %352 = vmatpush1.bf16.msra.mxu0 0
        %353 = vmatprep.subr.bf16.mxu0 0
        %354 = vmatpush1.bf16.msra.mxu0 0
        %355 = vmatprep.mubr.bf16.mxu0 0
        %356 = vmatmul.mubr.bf16.gmra.mrb[0].mxu0 %v259
        %v357 = vpop.f32.mrb[0].mxu0
        %v358 = vadd.f32 0.0, %v357
        %v359 = vpop.f32.mrb[0].mxu0
        %v360 = vpop.f32.mrb[0].mxu0
        %v361 = vadd.f32 0.0, %v360
        %v362 = vpop.f32.mrb[0].mxu0
        %363 = vmatprep.mubr.bf16.mxu0 0
        %364 = vmatmul.mubr.bf16.gmra.mrb[0].mxu0 %v260
        %v365 = vpop.f32.mrb[0].mxu0
        %v366 = vadd.f32 0.0, %v365
        %v367 = vpop.f32.mrb[0].mxu0
        %v368 = vpop.f32.mrb[0].mxu0
        %v369 = vadd.f32 0.0, %v368
        %v370 = vpop.f32.mrb[0].mxu0
        %371 = vmatprep.mubr.bf16.mxu0 0
        %372 = vmatmul.mubr.bf16.gmra.mrb[0].mxu0 %v261
        %v373 = vpop.f32.mrb[0].mxu0
        %v374 = vadd.f32 0.0, %v373
        %v375 = vpop.f32.mrb[0].mxu0
        %v376 = vpop.f32.mrb[0].mxu0
        %v377 = vadd.f32 0.0, %v376
        %v378 = vpop.f32.mrb[0].mxu0
        %379 = vmatprep.mubr.bf16.mxu0 0
        %380 = vmatmul.mubr.bf16.gmra.mrb[0].mxu0 %v262
        %v381 = vpop.f32.mrb[0].mxu0
        %v382 = vadd.f32 0.0, %v381
        %v383 = vpop.f32.mrb[0].mxu0
        %v384 = vpop.f32.mrb[0].mxu0
        %v385 = vadd.f32 0.0, %v384
        %v386 = vpop.f32.mrb[0].mxu0
        %387 = vmatprep.mubr.bf16.mxu0 0
        %388 = vmatmul.mubr.bf16.gmra.mrb[0].mxu0 %v263
        %v389 = vpop.f32.mrb[0].mxu0
        %v390 = vadd.f32 0.0, %v389
        %v391 = vpop.f32.mrb[0].mxu0
        %v392 = vpop.f32.mrb[0].mxu0
        %v393 = vadd.f32 0.0, %v392
        %v394 = vpop.f32.mrb[0].mxu0
        %395 = vmatprep.mubr.bf16.mxu0 0
        %396 = vmatmul.mubr.bf16.gmra.mrb[0].mxu0 %v264
        %v397 = vpop.f32.mrb[0].mxu0
        %v398 = vadd.f32 0.0, %v397
        %v399 = vpop.f32.mrb[0].mxu0
        %v400 = vpop.f32.mrb[0].mxu0
        %v401 = vadd.f32 0.0, %v400
        %v402 = vpop.f32.mrb[0].mxu0
        %403 = vmatprep.mubr.bf16.mxu0 0
        %404 = vmatmul.mubr.bf16.gmra.mrb[0].mxu0 %v265
        %v405 = vpop.f32.mrb[0].mxu0
        %v406 = vadd.f32 0.0, %v405
        %v407 = vpop.f32.mrb[0].mxu0
        %v408 = vpop.f32.mrb[0].mxu0
        %v409 = vadd.f32 0.0, %v408
        %v410 = vpop.f32.mrb[0].mxu0
        %411 = vmatprep.mubr.bf16.mxu0 0
        %412 = vmatmul.mubr.bf16.gmra.mrb[0].mxu0 %v266
        %v413 = vpop.f32.mrb[0].mxu0
        %v414 = vadd.f32 0.0, %v413
        %v415 = vpop.f32.mrb[0].mxu0
        %v416 = vpop.f32.mrb[0].mxu0
        %v417 = vadd.f32 0.0, %v416
        %v418 = vpop.f32.mrb[0].mxu0
        %419 = vdwg.mxu0
        %v420 = vld [vmem:[%s191] sm:$0xff]
        %v421 = vld [vmem:[%s191 + $0x8] sm:$0xff]
        %v422 = vld [vmem:[%s191 + $0x10] sm:$0xff]
        %v423 = vld [vmem:[%s191 + $0x18] sm:$0xff]
        %v424 = vld [vmem:[%s191 + $0x20] sm:$0xff]
        %v425 = vld [vmem:[%s191 + $0x28] sm:$0xff]
        %v426 = vld [vmem:[%s191 + $0x30] sm:$0xff]
        %v427 = vld [vmem:[%s191 + $0x38] sm:$0xff]
        %v428 = vld [vmem:[%s191 + $0x40] sm:$0xff]
        %v429 = vld [vmem:[%s191 + $0x48] sm:$0xff]
        %v430 = vld [vmem:[%s191 + $0x50] sm:$0xff]
        %v431 = vld [vmem:[%s191 + $0x58] sm:$0xff]
        %v432 = vld [vmem:[%s191 + $0x60] sm:$0xff]
        %v433 = vld [vmem:[%s191 + $0x68] sm:$0xff]
        %v434 = vld [vmem:[%s191 + $0x70] sm:$0xff]
        %v435 = vld [vmem:[%s191 + $0x78] sm:$0xff]
        %437 = vset.pattern.permute.xlu0 0
        %438 = vperm.xlu0 %437, %v420
        %v439 = vpop.permute.xlu0 %438
        %442 = vset.pattern.permute.xlu0 0
        %443 = vperm.xlu0 %442, %v421
        %v444 = vpop.permute.xlu0 %443
        %447 = vset.pattern.permute.xlu0 0
        %448 = vperm.xlu0 %447, %v422
        %v449 = vpop.permute.xlu0 %448
        %452 = vset.pattern.permute.xlu0 0
        %453 = vperm.xlu0 %452, %v423
        %v454 = vpop.permute.xlu0 %453
        %457 = vset.pattern.permute.xlu0 0
        %458 = vperm.xlu0 %457, %v424
        %v459 = vpop.permute.xlu0 %458
        %462 = vset.pattern.permute.xlu0 0
        %463 = vperm.xlu0 %462, %v425
        %v464 = vpop.permute.xlu0 %463
        %467 = vset.pattern.permute.xlu0 0
        %468 = vperm.xlu0 %467, %v426
        %v469 = vpop.permute.xlu0 %468
        %472 = vset.pattern.permute.xlu0 0
        %473 = vperm.xlu0 %472, %v427
        %v474 = vpop.permute.xlu0 %473
        %477 = vset.pattern.permute.xlu0 0
        %478 = vperm.xlu0 %477, %v428
        %v479 = vpop.permute.xlu0 %478
        %482 = vset.pattern.permute.xlu0 0
        %483 = vperm.xlu0 %482, %v429
        %v484 = vpop.permute.xlu0 %483
        %487 = vset.pattern.permute.xlu0 0
        %488 = vperm.xlu0 %487, %v430
        %v489 = vpop.permute.xlu0 %488
        %492 = vset.pattern.permute.xlu0 0
        %493 = vperm.xlu0 %492, %v431
        %v494 = vpop.permute.xlu0 %493
        %497 = vset.pattern.permute.xlu0 0
        %498 = vperm.xlu0 %497, %v432
        %v499 = vpop.permute.xlu0 %498
        %502 = vset.pattern.permute.xlu0 0
        %503 = vperm.xlu0 %502, %v433
        %v504 = vpop.permute.xlu0 %503
        %507 = vset.pattern.permute.xlu0 0
        %508 = vperm.xlu0 %507, %v434
        %v509 = vpop.permute.xlu0 %508
        %512 = vset.pattern.permute.xlu0 0
        %513 = vperm.xlu0 %512, %v435
        %v514 = vpop.permute.xlu0 %513
        %v516 = vmul.f32 %v358, %v439
        %v517 = vmul.f32 %v361, %v444
        %v518 = vmul.f32 %v366, %v449
        %v519 = vmul.f32 %v369, %v454
        %v520 = vmul.f32 %v374, %v459
        %v521 = vmul.f32 %v377, %v464
        %v522 = vmul.f32 %v382, %v469
        %v523 = vmul.f32 %v385, %v474
        %v524 = vmul.f32 %v390, %v479
        %v525 = vmul.f32 %v393, %v484
        %v526 = vmul.f32 %v398, %v489
        %v527 = vmul.f32 %v401, %v494
        %v528 = vmul.f32 %v406, %v499
        %v529 = vmul.f32 %v409, %v504
        %v530 = vmul.f32 %v414, %v509
        %v531 = vmul.f32 %v417, %v514
        %v532 = vpack.c.bf16 %v517, %v516
        %v533 = vpack.c.bf16 %v519, %v518
        %v534 = vpack.c.bf16 %v521, %v520
        %v535 = vpack.c.bf16 %v523, %v522
        %v536 = vpack.c.bf16 %v525, %v524
        %v537 = vpack.c.bf16 %v527, %v526
        %v538 = vpack.c.bf16 %v529, %v528
        %v539 = vpack.c.bf16 %v531, %v530
        %v548 = vunpack.c.l.b16 %v532
        %v549 = vunpack.c.h.b16 %v532
        %v550 = vunpack.c.l.b16 %v533
        %v551 = vunpack.c.h.b16 %v533
        %v552 = vunpack.c.l.b16 %v534
        %v553 = vunpack.c.h.b16 %v534
        %v554 = vunpack.c.l.b16 %v535
        %v555 = vunpack.c.h.b16 %v535
        %v556 = vunpack.c.l.b16 %v536
        %v557 = vunpack.c.h.b16 %v536
        %v558 = vunpack.c.l.b16 %v537
        %v559 = vunpack.c.h.b16 %v537
        %v560 = vunpack.c.l.b16 %v538
        %v561 = vunpack.c.h.b16 %v538
        %v562 = vunpack.c.l.b16 %v539
        %v563 = vunpack.c.h.b16 %v539
        %v564 = vpack.c.b16 %v548, %v548
        %v565 = vpack.c.b16 %v549, %v549
        %v566 = vpack.c.b16 %v550, %v550
        %v567 = vpack.c.b16 %v551, %v551
        %v568 = vpack.c.b16 %v552, %v552
        %v569 = vpack.c.b16 %v553, %v553
        %v570 = vpack.c.b16 %v554, %v554
        %v571 = vpack.c.b16 %v555, %v555
        %v572 = vpack.c.b16 %v556, %v556
        %v573 = vpack.c.b16 %v557, %v557
        %v574 = vpack.c.b16 %v558, %v558
        %v575 = vpack.c.b16 %v559, %v559
        %v576 = vpack.c.b16 %v560, %v560
        %v577 = vpack.c.b16 %v561, %v561
        %v578 = vpack.c.b16 %v562, %v562
        %v579 = vpack.c.b16 %v563, %v563
        %596 = vst [vmem:[%s180] sm:$0xf] %v564
        %597 = vst [vmem:[%s180 + $0x4] sm:$0xf] %v565
        %598 = vst [vmem:[%s180 + $0x8] sm:$0xf] %v566
        %599 = vst [vmem:[%s180 + $0xc] sm:$0xf] %v567
        %600 = vst [vmem:[%s180 + $0x10] sm:$0xf] %v568
        %601 = vst [vmem:[%s180 + $0x14] sm:$0xf] %v569
        %602 = vst [vmem:[%s180 + $0x18] sm:$0xf] %v570
        %603 = vst [vmem:[%s180 + $0x1c] sm:$0xf] %v571
        %604 = vst [vmem:[%s180 + $0x20] sm:$0xf] %v572
        %605 = vst [vmem:[%s180 + $0x24] sm:$0xf] %v573
        %606 = vst [vmem:[%s180 + $0x28] sm:$0xf] %v574
        %607 = vst [vmem:[%s180 + $0x2c] sm:$0xf] %v575
        %608 = vst [vmem:[%s180 + $0x30] sm:$0xf] %v576
        %609 = vst [vmem:[%s180 + $0x34] sm:$0xf] %v577
        %610 = vst [vmem:[%s180 + $0x38] sm:$0xf] %v578
        %611 = vst [vmem:[%s180 + $0x3c] sm:$0xf] %v579
        %s612 = sand.u32 %s98, 1
        %s613 = scalar_lea.sflag [#allocation3], %s612
        %s614 = sand.u32 %s98, 1
        %s615 = smul.addr %s614, 64
        %s616 = scalar_lea.vmem [#allocation2], %s615
        // Predicated region
        $region33: #{tpu_custom_call.1} parent=31 // pred_check
          %p617 = pneg %p108
        $region34: #{tpu_custom_call.1} parent=31 // pred_check_branch
          %619 = sbr.rel (%p617) target = $region36
        $region35: #{tpu_custom_call.1} parent=31 // pred_region
          %s620 = smul.u32 16, %s17
          %s622 = ssub.s32 1024, 1024
          %623 = vsyncadd %s613, %s622
          %s624 = smul.addr %s620, 64
          %s625 = scalar_lea.hbm %s3, %s624
          %s626 = sshll.u32 %s616, 4
          %s627 = int_to_ptr.vmem [resolvable:$true] %s626
          %632 = dma.vmem_to_hbm [thread:$0]  %s627, 1024, %s625, %s613, 64, 64, 4
        $region36: #{tpu_custom_call.1} parent=31 // pred_fallthru
          _
      $region32: #{tpu_custom_call.1} parent=5 // pred_fallthru
        _
      %p633 = scmp.le.s32.totalorder 2, %s12
      // Predicated region
      $region37: #{tpu_custom_call.1} parent=5 // pred_check
        %p634 = pneg %p633
      $region38: #{tpu_custom_call.1} parent=5 // pred_check_branch
        %636 = sbr.rel (%p634) target = $region40
      $region39: #{tpu_custom_call.1} parent=5 // pred_region
        %s637 = ssub.s32 %s12, 2
        // Predicated region
        $region41: #{tpu_custom_call.1} parent=39 // pred_check
          %p638 = pneg %p114
        $region42: #{tpu_custom_call.1} parent=39 // pred_check_branch
          %640 = sbr.rel (%p638) target = $region44
        $region43: #{tpu_custom_call.1} parent=39 // pred_region
          %s641 = sand.u32 %s99, 1
          %s642 = scalar_lea.sflag [#allocation3], %s641
          %s643 = sand.u32 %s99, 1
          %s644 = smul.addr %s643, 64
          %s645 = scalar_lea.vmem [#allocation2], %s644
          %646 = dma.done %s642, 1024
        $region44: #{tpu_custom_call.1} parent=39 // pred_fallthru
          _
      $region40: #{tpu_custom_call.1} parent=5 // pred_fallthru
        _
    $region6: #{tpu_custom_call.1} parent=1 // loop_footer
      %s16 = sadd.s32 1, %s12
    $region7: #{tpu_custom_call.1} parent=1 // loop_footer_branch
      %11 = sbr.rel target = $region3
    $region8: #{tpu_custom_call.1} parent=1 // loop_exit
      _
    %647 = vsyncpa [#allocation3], 1
    %s648 = scalar_lea.sflag [#allocation3], 1
    %649 = vsyncpa %s648, 1

</llo_original>
